<compile_context>
chip_gen: v7x
topology: tpu7x:2x2x1
jax: 0.10.0
libtpu: 0.0.40
codegen_flags: <defaults>
</compile_context>

<pallas_src>
import functools
import math

import numpy as np
import jax
import jax.numpy as jnp
from jax.experimental import pallas as pl
from jax.experimental.pallas import tpu as pltpu


# ---------------------------------------------------------------------------
# helpers
# ---------------------------------------------------------------------------

_SQRT_2_OVER_PI = 0.7978845608028654
_PARALLEL1 = pltpu.CompilerParams(dimension_semantics=("parallel",))


def _gelu(x):
    # tanh-approximate GELU (EUP-friendly); used consistently in kernels and reference.
    return 0.5 * x * (1.0 + jnp.tanh(_SQRT_2_OVER_PI * (x + 0.044715 * x * x * x)))


def _cdiv(a, b):
    return -(-a // b)


# ---------------------------------------------------------------------------
# fused linear:  y = act(x @ w + b)
# ---------------------------------------------------------------------------

def _linear_kernel(x_ref, w_ref, b_ref, o_ref, *, activation):
    x = x_ref[...].astype(jnp.float32)
    w = w_ref[...].astype(jnp.float32)
    y = jnp.dot(x, w, preferred_element_type=jnp.float32)
    y = y + b_ref[...].astype(jnp.float32)
    if activation == "gelu":
        y = _gelu(y)
    o_ref[...] = y.astype(o_ref.dtype)


def linear(x, w, b, activation="none", *, tile_m=512):
    """x: (M, K), w: (K, N), b: (N,) -> act(x @ w + b)."""
    m, k = x.shape
    n = w.shape[1]
    if m <= tile_m:
        tm, mp = m, m
    else:
        tm = tile_m                       # multiple of 8
        mp = _cdiv(m, tm) * tm
    if mp != m:
        x = jnp.pad(x, ((0, mp - m), (0, 0)))
    out = pl.pallas_call(
        functools.partial(_linear_kernel, activation=activation),
        out_shape=jax.ShapeDtypeStruct((mp, n), x.dtype),
        grid_spec=pltpu.PrefetchScalarGridSpec(
            num_scalar_prefetch=0,
            grid=(mp // tm,),
            in_specs=[
                pl.BlockSpec((tm, k), lambda i: (i, 0)),
                pl.BlockSpec((k, n), lambda i: (0, 0)),
                pl.BlockSpec((1, n), lambda i: (0, 0)),
            ],
            out_specs=pl.BlockSpec((tm, n), lambda i: (i, 0)),
        ),
        compiler_params=_PARALLEL1,
    )(x, w, b.reshape(1, n))
    return out[:m]


# ---------------------------------------------------------------------------
# LayerNorm (optionally fused with a preceding residual add and trailing GELU)
# ---------------------------------------------------------------------------

def _ln_core(x, g, b, *, eps, post_gelu):
    mu = jnp.mean(x, axis=-1, keepdims=True)
    xc = x - mu
    var = jnp.mean(xc * xc, axis=-1, keepdims=True)
    y = xc * jax.lax.rsqrt(var + eps)
    y = y * g + b
    if post_gelu:
        y = _gelu(y)
    return y


def _ln_kernel(x_ref, g_ref, b_ref, o_ref, *, eps, post_gelu):
    x = x_ref[...].astype(jnp.float32)
    o_ref[...] = _ln_core(x, g_ref[...], b_ref[...],
                          eps=eps, post_gelu=post_gelu).astype(o_ref.dtype)


def _ln_res_kernel(x_ref, r_ref, g_ref, b_ref, o_ref, *, eps, post_gelu):
    x = x_ref[...].astype(jnp.float32) + r_ref[...].astype(jnp.float32)
    o_ref[...] = _ln_core(x, g_ref[...], b_ref[...],
                          eps=eps, post_gelu=post_gelu).astype(o_ref.dtype)


def layer_norm(x, gamma, beta, *, residual=None, eps=1e-6, post_gelu=False, tile_m=512):
    """LayerNorm over the last dim of (rows, D); optionally LN(x + residual), then GELU."""
    m, d = x.shape
    if m <= tile_m:
        tm, mp = m, m
    else:
        tm = tile_m
        mp = _cdiv(m, tm) * tm
    pad = mp - m
    g2 = gamma.reshape(1, d)
    b2 = beta.reshape(1, d)

    if residual is None:
        operands = (jnp.pad(x, ((0, pad), (0, 0))) if pad else x,)
        kernel = functools.partial(_ln_kernel, eps=eps, post_gelu=post_gelu)
        data_specs = [pl.BlockSpec((tm, d), lambda i: (i, 0))]
    else:
        operands = (jnp.pad(x, ((0, pad), (0, 0))) if pad else x,
                    jnp.pad(residual, ((0, pad), (0, 0))) if pad else residual)
        kernel = functools.partial(_ln_res_kernel, eps=eps, post_gelu=post_gelu)
        data_specs = [pl.BlockSpec((tm, d), lambda i: (i, 0))] * 2

    out = pl.pallas_call(
        kernel,
        out_shape=jax.ShapeDtypeStruct((mp, d), x.dtype),
        grid_spec=pltpu.PrefetchScalarGridSpec(
            num_scalar_prefetch=0,
            grid=(mp // tm,),
            in_specs=data_specs + [pl.BlockSpec((1, d), lambda i: (0, 0))] * 2,
            out_specs=pl.BlockSpec((tm, d), lambda i: (i, 0)),
        ),
        compiler_params=_PARALLEL1,
    )(*operands, g2, b2)
    return out[:m]


# ---------------------------------------------------------------------------
# elementwise add (relative positional-embedding add)
# ---------------------------------------------------------------------------

def _add_kernel(x_ref, e_ref, o_ref):
    o_ref[...] = x_ref[...] + e_ref[...]


def pallas_add(x, e):
    shape = jnp.broadcast_shapes(x.shape, e.shape)
    xb = jnp.broadcast_to(x, shape)
    eb = jnp.broadcast_to(e, shape).astype(xb.dtype)
    nd = len(shape)
    return pl.pallas_call(
        _add_kernel,
        out_shape=jax.ShapeDtypeStruct(shape, xb.dtype),
        grid_spec=pltpu.PrefetchScalarGridSpec(
            num_scalar_prefetch=0,
            grid=(1,),
            in_specs=[pl.BlockSpec(shape, lambda i: (0,) * nd)] * 2,
            out_specs=pl.BlockSpec(shape, lambda i: (0,) * nd),
        ),
        compiler_params=_PARALLEL1,
    )(xb, eb)


# ---------------------------------------------------------------------------
# batched softmax attention core:  softmax(q k^T * scale) v  over (G, L, hd)
# ---------------------------------------------------------------------------

def _attn_kernel(q_ref, k_ref, v_ref, o_ref, *, scale):
    q = q_ref[...].astype(jnp.float32) * scale
    k = k_ref[...].astype(jnp.float32)
    v = v_ref[...].astype(jnp.float32)
    s = jnp.einsum("gqd,gkd->gqk", q, k, preferred_element_type=jnp.float32)
    s = s - jnp.max(s, axis=-1, keepdims=True)
    p = jnp.exp(s)
    p = p / jnp.sum(p, axis=-1, keepdims=True)
    o = jnp.einsum("gqk,gkd->gqd", p, v, preferred_element_type=jnp.float32)
    o_ref[...] = o.astype(o_ref.dtype)


def attention(q, k, v, *, scale, tile_g=128):
    g, l, hd = q.shape
    if g <= tile_g:
        tg, gp = g, g
    else:
        tg = tile_g
        gp = _cdiv(g, tg) * tg
    if gp != g:
        pad = ((0, gp - g), (0, 0), (0, 0))
        q, k, v = jnp.pad(q, pad), jnp.pad(k, pad), jnp.pad(v, pad)
    out = pl.pallas_call(
        functools.partial(_attn_kernel, scale=scale),
        out_shape=jax.ShapeDtypeStruct((gp, l, hd), q.dtype),
        grid_spec=pltpu.PrefetchScalarGridSpec(
            num_scalar_prefetch=0,
            grid=(gp // tg,),
            in_specs=[pl.BlockSpec((tg, l, hd), lambda i: (i, 0, 0))] * 3,
            out_specs=pl.BlockSpec((tg, l, hd), lambda i: (i, 0, 0)),
        ),
        compiler_params=_PARALLEL1,
    )(q, k, v)
    return out[:g]


# ---------------------------------------------------------------------------
# Stem kernels: single-channel 3x3 conv (+GELU), and 1x1 pointwise conv + residual
# ---------------------------------------------------------------------------

def _conv3x3_kernel(xpad_ref, w_ref, b_ref, o_ref, *, height, width, apply_gelu):
    xp = xpad_ref[0].astype(jnp.float32)               # (H+2, W+2)
    acc = jnp.zeros((height, width), jnp.float32)
    for dh in range(3):
        for dw in range(3):
            acc = acc + w_ref[dh, dw] * xp[dh:dh + height, dw:dw + width]
    acc = acc + b_ref[0]
    if apply_gelu:
        acc = _gelu(acc)
    o_ref[0] = acc.astype(o_ref.dtype)


def conv3x3(x, w, b, *, apply_gelu):
    """Conv2d(1, 1, kernel=3, padding=1, stride=1) on (B, H, W), optional fused GELU."""
    batch, height, width = x.shape
    xpad = jnp.pad(x, ((0, 0), (1, 1), (1, 1)))
    return pl.pallas_call(
        functools.partial(_conv3x3_kernel, height=height, width=width,
                          apply_gelu=apply_gelu),
        out_shape=jax.ShapeDtypeStruct((batch, height, width), x.dtype),
        grid_spec=pltpu.PrefetchScalarGridSpec(
            num_scalar_prefetch=0,
            grid=(batch,),
            in_specs=[
                pl.BlockSpec((1, height + 2, width + 2), lambda bi: (bi, 0, 0)),
                pl.BlockSpec(memory_space=pltpu.MemorySpace.SMEM),   # (3,3) taps
                pl.BlockSpec(memory_space=pltpu.MemorySpace.SMEM),   # (1,) bias
            ],
            out_specs=pl.BlockSpec((1, height, width), lambda bi: (bi, 0, 0)),
        ),
        compiler_params=_PARALLEL1,
    )(xpad, w, b)


def _pointwise_res_kernel(y_ref, x_ref, wp_ref, bp_ref, o_ref):
    y = jnp.dot(wp_ref[...].astype(jnp.float32), y_ref[0].astype(jnp.float32),
                preferred_element_type=jnp.float32)
    o_ref[0] = (y + bp_ref[...] + x_ref[0].astype(jnp.float32)).astype(o_ref.dtype)


def pointwise_residual(y, x, wp, bp):
    """out[b] = wp @ y[b] + bp + x[b]  (the Stem's 1x1 conv over win_size + residual)."""
    batch, height, width = y.shape
    return pl.pallas_call(
        _pointwise_res_kernel,
        out_shape=jax.ShapeDtypeStruct((batch, height, width), x.dtype),
        grid_spec=pltpu.PrefetchScalarGridSpec(
            num_scalar_prefetch=0,
            grid=(batch,),
            in_specs=[
                pl.BlockSpec((1, height, width), lambda bi: (bi, 0, 0)),
                pl.BlockSpec((1, height, width), lambda bi: (bi, 0, 0)),
                pl.BlockSpec((height, height), lambda bi: (0, 0)),
                pl.BlockSpec((height, 1), lambda bi: (0, 0)),
            ],
            out_specs=pl.BlockSpec((1, height, width), lambda bi: (bi, 0, 0)),
        ),
        compiler_params=_PARALLEL1,
    )(y, x, wp, bp.reshape(height, 1))


# ---------------------------------------------------------------------------
# parameters + forward pass (Pallas) + pure-JAX reference
# ---------------------------------------------------------------------------

def init_params(key, *, win_size, input_dim, d_model, head_num,
                mlp_ratio=4, max_len=500, ori_d=8):
    del head_num  # only used in forward
    keys = list(jax.random.split(key, 64))
    it = iter(keys)

    def nrm(shape, scale=0.05):
        return scale * jax.random.normal(next(it), shape, dtype=jnp.float32)

    hidden = input_dim * 4
    mlp_hidden = int(ori_d * mlp_ratio)
    return {
        "stem": {
            "w1": nrm((3, 3), 0.3), "b1": nrm((1,), 0.1),
            "w2": nrm((3, 3), 0.3), "b2": nrm((1,), 0.1),
            "w3": nrm((3, 3), 0.3), "b3": nrm((1,), 0.1),
            "wp": nrm((win_size, win_size), 0.3), "bp": nrm((win_size,), 0.1),
        },
        "fc_in1": {
            "w1": nrm((input_dim, hidden)), "b1": nrm((hidden,), 0.01),
            "w2": nrm((hidden, d_model)), "b2": nrm((d_model,), 0.01),
        },
        "block1": {
            "pe_table": nrm((2 * max_len + 1, d_model)),
            "w_in": nrm((d_model, 3 * d_model)), "b_in": nrm((3 * d_model,), 0.01),
            "w_out": nrm((d_model, d_model)), "b_out": nrm((d_model,), 0.01),
            "ln0_g": 1.0 + nrm((d_model,)), "ln0_b": nrm((d_model,), 0.01),
            "ln1_g": 1.0 + nrm((d_model,)), "ln1_b": nrm((d_model,), 0.01),
            "ln2_g": 1.0 + nrm((d_model,)), "ln2_b": nrm((d_model,), 0.01),
            "mlp_w1": nrm((d_model, mlp_hidden)), "mlp_b1": nrm((mlp_hidden,), 0.01),
            "mlp_w2": nrm((mlp_hidden, d_model)), "mlp_b2": nrm((d_model,), 0.01),
        },
        "fc_out1": {"w": nrm((d_model, d_model // 2)), "b": nrm((d_model // 2,), 0.01)},
        "fc_out2": {"w": nrm((d_model // 4, 1)), "b": nrm((1,), 0.01)},
    }


def transformer_model_forward(params, x, *, head_num=16):
    batch, height, width = x.shape          # (B, win_size, input_dim)
    dtype = x.dtype
    st = params["stem"]

    # --- Stem: conv+GELU, conv+GELU, conv, 1x1 pointwise over H, residual
    y = conv3x3(x, st["w1"], st["b1"], apply_gelu=True)
    y = conv3x3(y, st["w2"], st["b2"], apply_gelu=True)
    y = conv3x3(y, st["w3"], st["b3"], apply_gelu=False)
    x_stem = pointwise_residual(y, x, st["wp"], st["bp"])

    # --- fc_in1 (Mlp): Linear -> GELU -> Linear (dropout p=0 is identity)
    fi = params["fc_in1"]
    h = linear(x_stem.reshape(batch * height, width), fi["w1"], fi["b1"], "gelu")
    h = linear(h, fi["w2"], fi["b2"])
    d_model = fi["w2"].shape[1]
    h = h.reshape(batch, height, d_model)

    # --- TransformerBlock 1
    blk = params["block1"]
    seq = height
    # relative positional embedding; static distance table, gathered with jnp.
    dist = np.arange(seq)[None, :] - np.arange(seq)[:, None] + seq          # (S, S)
    emb = blk["pe_table"][jnp.asarray(dist)]                                # (S, S, D)
    bshape = jnp.broadcast_shapes(h.shape, emb.shape)
    x_pe = pallas_add(jnp.broadcast_to(h, bshape),
                      jnp.broadcast_to(emb.astype(dtype), bshape))

    # nn.MultiheadAttention(batch_first=False): axis 0 is the attention length L,
    # axis 1 is the MHA batch N (this is what the module actually computes).
    l_len, n_batch, e = x_pe.shape
    hd = e // head_num
    qkv = linear(x_pe.reshape(l_len * n_batch, e), blk["w_in"], blk["b_in"])
    qkv = qkv.reshape(l_len, n_batch, 3, e)

    def to_heads(t):  # (L, N, E) -> (N*heads, L, hd)
        return t.reshape(l_len, n_batch, head_num, hd).transpose(1, 2, 0, 3).reshape(
            n_batch * head_num, l_len, hd)

    qh = to_heads(qkv[:, :, 0, :])
    kh = to_heads(qkv[:, :, 1, :])
    vh = to_heads(qkv[:, :, 2, :])
    oh = attention(qh, kh, vh, scale=1.0 / math.sqrt(hd))
    attn = oh.reshape(n_batch, head_num, l_len, hd).transpose(2, 0, 1, 3).reshape(
        l_len * n_batch, e)
    attn = linear(attn, blk["w_out"], blk["b_out"])

    # x = GELU(LayerNorm(x_pe + attn))   (fused residual + LN + GELU)
    y = layer_norm(x_pe.reshape(l_len * n_batch, e), blk["ln0_g"], blk["ln0_b"],
                   residual=attn, post_gelu=True)
    # x_mlp = Mlp(LayerNorm1(y))
    h1 = layer_norm(y, blk["ln1_g"], blk["ln1_b"])
    m = linear(h1, blk["mlp_w1"], blk["mlp_b1"], "gelu")
    m = linear(m, blk["mlp_w2"], blk["mlp_b2"])
    # x = LayerNorm2(x_mlp + y)
    out_blk = layer_norm(m, blk["ln2_g"], blk["ln2_b"], residual=y).reshape(
        l_len, n_batch, e)

    # --- head: last position along axis 1, fc_out1, pool, fc_out2
    z = out_blk[:, -1, :]                                    # (B, d_model)
    fo1 = params["fc_out1"]
    z = linear(z, fo1["w"], fo1["b"])                        # (B, d_model/2)
    # AdaptiveAvgPool1d(d_model/4) on length d_model/2 averages adjacent pairs; it is
    # folded exactly into the final linear:  w_exp[2i] = w_exp[2i+1] = w[i] / 2.
    fo2 = params["fc_out2"]
    w_exp = jnp.repeat(fo2["w"], 2, axis=0) * 0.5            # (d_model/2, 1)
    z = linear(z, w_exp, fo2["b"])                           # (B, 1)
    return z


def transformer_model_ref(params, x, *, head_num=16):
    """Pure-JAX reference of the same forward pass (same GELU approximation)."""
    st = params["stem"]

    def conv_ref(t, w, b):
        tp = jnp.pad(t, ((0, 0), (1, 1), (1, 1)))
        hh, ww = t.shape[1], t.shape[2]
        acc = jnp.zeros_like(t)
        for dh in range(3):
            for dw in range(3):
                acc = acc + w[dh, dw] * tp[:, dh:dh + hh, dw:dw + ww]
        return acc + b[0]

    y = _gelu(conv_ref(x, st["w1"], st["b1"]))
    y = _gelu(conv_ref(y, st["w2"], st["b2"]))
    y = conv_ref(y, st["w3"], st["b3"])
    y = jnp.einsum("hc,bcw->bhw", st["wp"], y) + st["bp"][None, :, None]
    x1 = y + x

    fi = params["fc_in1"]
    h = _gelu(x1 @ fi["w1"] + fi["b1"]) @ fi["w2"] + fi["b2"]

    blk = params["block1"]
    seq = h.shape[1]
    dist = np.arange(seq)[None, :] - np.arange(seq)[:, None] + seq
    emb = blk["pe_table"][jnp.asarray(dist)]
    x_pe = h + emb

    l_len, n_batch, e = x_pe.shape
    hd = e // head_num
    qkv = x_pe @ blk["w_in"] + blk["b_in"]
    q, k, v = qkv[..., :e], qkv[..., e:2 * e], qkv[..., 2 * e:]

    def heads(t):  # (L, N, E) -> (N, heads, L, hd)
        return t.reshape(l_len, n_batch, head_num, hd).transpose(1, 2, 0, 3)

    qh, kh, vh = heads(q), heads(k), heads(v)
    s = jnp.einsum("nhqd,nhkd->nhqk", qh, kh) / math.sqrt(hd)
    p = jax.nn.softmax(s, axis=-1)
    o = jnp.einsum("nhqk,nhkd->nhqd", p, vh)
    attn = o.transpose(2, 0, 1, 3).reshape(l_len, n_batch, e)
    attn = attn @ blk["w_out"] + blk["b_out"]

    def ln(t, g, b):
        mu = jnp.mean(t, axis=-1, keepdims=True)
        var = jnp.mean((t - mu) ** 2, axis=-1, keepdims=True)
        return (t - mu) / jnp.sqrt(var + 1e-6) * g + b

    yb = _gelu(ln(x_pe + attn, blk["ln0_g"], blk["ln0_b"]))
    h1 = ln(yb, blk["ln1_g"], blk["ln1_b"])
    m = _gelu(h1 @ blk["mlp_w1"] + blk["mlp_b1"]) @ blk["mlp_w2"] + blk["mlp_b2"]
    out_blk = ln(m + yb, blk["ln2_g"], blk["ln2_b"])

    z = out_blk[:, -1, :]
    z = z @ params["fc_out1"]["w"] + params["fc_out1"]["b"]
    z = 0.5 * (z[:, 0::2] + z[:, 1::2])                      # AdaptiveAvgPool1d(d/4)
    z = z @ params["fc_out2"]["w"] + params["fc_out2"]["b"]
    return z


if __name__ == "__main__":
    key = jax.random.PRNGKey(0)
    k_param, k_x = jax.random.split(key)

    # Small shapes implied by the forward pass: x is (batch, win_size, input_dim), with
    # batch == win_size (required by the module's relative-PE broadcast and by the Stem's
    # win_size-channel pointwise conv), d_model divisible by head_num=16 and by 4.
    batch = win_size = 8
    input_dim = 16
    d_model = 64
    head_num = 16

    params = init_params(k_param, win_size=win_size, input_dim=input_dim,
                         d_model=d_model, head_num=head_num)
    x = jax.random.normal(k_x, (batch, win_size, input_dim), dtype=jnp.float32)

    out = jax.block_until_ready(transformer_model_forward(params, x, head_num=head_num))
    ref = jax.block_until_ready(transformer_model_ref(params, x, head_num=head_num))

    assert out.shape == (batch, 1), out.shape
    assert out.dtype == ref.dtype
    assert jnp.allclose(out, ref, atol=2e-3, rtol=2e-3), float(jnp.max(jnp.abs(out - ref)))
    print("KERNEL_OK")
</pallas_src>

<mosaic_0001>
module attributes {stable_mosaic.version = 11 : i64} {
  func.func @_conv3x3_kernel(%arg0: i32, %arg1: memref<1x10x18xf32, #tpu.memory_space<vmem>>, %arg2: memref<3x3xf32, #tpu.memory_space<smem>>, %arg3: memref<1xf32, #tpu.memory_space<smem>>, %arg4: memref<1x8x16xf32, #tpu.memory_space<vmem>>) attributes {dimension_semantics = [#tpu.dimension_semantics<parallel>], iteration_bounds = array<i64: 8>, scalar_prefetch = 0 : i64, scratch_operands = 0 : i64, tpu.core_type = #tpu.core_type<tc>, window_params = [{transform_indices = @transform_0, window_bounds = array<i64: 1, 10, 18>}, {transform_indices = @transform_1, window_bounds = array<i64: 3, 3>}, {transform_indices = @transform_2, window_bounds = array<i64: 1>}, {transform_indices = @transform_3, window_bounds = array<i64: 1, 8, 16>}]} {
    %c0 = arith.constant 0 : index
    %c0_0 = arith.constant 0 : index
    %c0_1 = arith.constant 0 : index
    %0 = vector.load %arg1[%c0, %c0_0, %c0_1] : memref<1x10x18xf32, #tpu.memory_space<vmem>>, vector<1x10x18xf32>
    %1 = vector.shape_cast %0 : vector<1x10x18xf32> to vector<10x18xf32>
    %cst = arith.constant 0.000000e+00 : f32
    %2 = vector.broadcast %cst : f32 to vector<8x16xf32>
    %c0_2 = arith.constant 0 : index
    %c0_3 = arith.constant 0 : index
    %3 = memref.load %arg2[%c0_2, %c0_3] : memref<3x3xf32, #tpu.memory_space<smem>>
    %4 = vector.extract_strided_slice %1 {offsets = [0, 0], sizes = [8, 16], strides = [1, 1]} : vector<10x18xf32> to vector<8x16xf32>
    %5 = vector.broadcast %3 : f32 to vector<8x16xf32>
    %6 = arith.mulf %5, %4 : vector<8x16xf32>
    %7 = arith.addf %2, %6 : vector<8x16xf32>
    %c0_4 = arith.constant 0 : index
    %c1 = arith.constant 1 : index
    %8 = memref.load %arg2[%c0_4, %c1] : memref<3x3xf32, #tpu.memory_space<smem>>
    %9 = vector.extract_strided_slice %1 {offsets = [0, 1], sizes = [8, 16], strides = [1, 1]} : vector<10x18xf32> to vector<8x16xf32>
    %10 = vector.broadcast %8 : f32 to vector<8x16xf32>
    %11 = arith.mulf %10, %9 : vector<8x16xf32>
    %12 = arith.addf %7, %11 : vector<8x16xf32>
    %c0_5 = arith.constant 0 : index
    %c2 = arith.constant 2 : index
    %13 = memref.load %arg2[%c0_5, %c2] : memref<3x3xf32, #tpu.memory_space<smem>>
    %14 = vector.extract_strided_slice %1 {offsets = [0, 2], sizes = [8, 16], strides = [1, 1]} : vector<10x18xf32> to vector<8x16xf32>
    %15 = vector.broadcast %13 : f32 to vector<8x16xf32>
    %16 = arith.mulf %15, %14 : vector<8x16xf32>
    %17 = arith.addf %12, %16 : vector<8x16xf32>
    %c1_6 = arith.constant 1 : index
    %c0_7 = arith.constant 0 : index
    %18 = memref.load %arg2[%c1_6, %c0_7] : memref<3x3xf32, #tpu.memory_space<smem>>
    %19 = vector.extract_strided_slice %1 {offsets = [1, 0], sizes = [8, 16], strides = [1, 1]} : vector<10x18xf32> to vector<8x16xf32>
    %20 = vector.broadcast %18 : f32 to vector<8x16xf32>
    %21 = arith.mulf %20, %19 : vector<8x16xf32>
    %22 = arith.addf %17, %21 : vector<8x16xf32>
    %c1_8 = arith.constant 1 : index
    %c1_9 = arith.constant 1 : index
    %23 = memref.load %arg2[%c1_8, %c1_9] : memref<3x3xf32, #tpu.memory_space<smem>>
    %24 = vector.extract_strided_slice %1 {offsets = [1, 1], sizes = [8, 16], strides = [1, 1]} : vector<10x18xf32> to vector<8x16xf32>
    %25 = vector.broadcast %23 : f32 to vector<8x16xf32>
    %26 = arith.mulf %25, %24 : vector<8x16xf32>
    %27 = arith.addf %22, %26 : vector<8x16xf32>
    %c1_10 = arith.constant 1 : index
    %c2_11 = arith.constant 2 : index
    %28 = memref.load %arg2[%c1_10, %c2_11] : memref<3x3xf32, #tpu.memory_space<smem>>
    %29 = vector.extract_strided_slice %1 {offsets = [1, 2], sizes = [8, 16], strides = [1, 1]} : vector<10x18xf32> to vector<8x16xf32>
    %30 = vector.broadcast %28 : f32 to vector<8x16xf32>
    %31 = arith.mulf %30, %29 : vector<8x16xf32>
    %32 = arith.addf %27, %31 : vector<8x16xf32>
    %c2_12 = arith.constant 2 : index
    %c0_13 = arith.constant 0 : index
    %33 = memref.load %arg2[%c2_12, %c0_13] : memref<3x3xf32, #tpu.memory_space<smem>>
    %34 = vector.extract_strided_slice %1 {offsets = [2, 0], sizes = [8, 16], strides = [1, 1]} : vector<10x18xf32> to vector<8x16xf32>
    %35 = vector.broadcast %33 : f32 to vector<8x16xf32>
    %36 = arith.mulf %35, %34 : vector<8x16xf32>
    %37 = arith.addf %32, %36 : vector<8x16xf32>
    %c2_14 = arith.constant 2 : index
    %c1_15 = arith.constant 1 : index
    %38 = memref.load %arg2[%c2_14, %c1_15] : memref<3x3xf32, #tpu.memory_space<smem>>
    %39 = vector.extract_strided_slice %1 {offsets = [2, 1], sizes = [8, 16], strides = [1, 1]} : vector<10x18xf32> to vector<8x16xf32>
    %40 = vector.broadcast %38 : f32 to vector<8x16xf32>
    %41 = arith.mulf %40, %39 : vector<8x16xf32>
    %42 = arith.addf %37, %41 : vector<8x16xf32>
    %c2_16 = arith.constant 2 : index
    %c2_17 = arith.constant 2 : index
    %43 = memref.load %arg2[%c2_16, %c2_17] : memref<3x3xf32, #tpu.memory_space<smem>>
    %44 = vector.extract_strided_slice %1 {offsets = [2, 2], sizes = [8, 16], strides = [1, 1]} : vector<10x18xf32> to vector<8x16xf32>
    %45 = vector.broadcast %43 : f32 to vector<8x16xf32>
    %46 = arith.mulf %45, %44 : vector<8x16xf32>
    %47 = arith.addf %42, %46 : vector<8x16xf32>
    %c0_18 = arith.constant 0 : index
    %48 = memref.load %arg3[%c0_18] : memref<1xf32, #tpu.memory_space<smem>>
    %49 = vector.broadcast %48 : f32 to vector<8x16xf32>
    %50 = arith.addf %47, %49 : vector<8x16xf32>
    %cst_19 = arith.constant 5.000000e-01 : f32
    %51 = vector.broadcast %cst_19 : f32 to vector<8x16xf32>
    %52 = arith.mulf %51, %50 : vector<8x16xf32>
    %cst_20 = arith.constant 4.471500e-02 : f32
    %53 = vector.broadcast %cst_20 : f32 to vector<8x16xf32>
    %54 = arith.mulf %53, %50 : vector<8x16xf32>
    %55 = arith.mulf %54, %50 : vector<8x16xf32>
    %56 = arith.mulf %55, %50 : vector<8x16xf32>
    %57 = arith.addf %50, %56 : vector<8x16xf32>
    %cst_21 = arith.constant 0.797884583 : f32
    %58 = vector.broadcast %cst_21 : f32 to vector<8x16xf32>
    %59 = arith.mulf %58, %57 : vector<8x16xf32>
    %60 = math.tanh %59 : vector<8x16xf32>
    %cst_22 = arith.constant 1.000000e+00 : f32
    %61 = vector.broadcast %cst_22 : f32 to vector<8x16xf32>
    %62 = arith.addf %61, %60 : vector<8x16xf32>
    %63 = arith.mulf %52, %62 : vector<8x16xf32>
    %c0_23 = arith.constant 0 : index
    %c0_24 = arith.constant 0 : index
    %c0_25 = arith.constant 0 : index
    %64 = vector.load %arg4[%c0_23, %c0_24, %c0_25] : memref<1x8x16xf32, #tpu.memory_space<vmem>>, vector<1x8x16xf32>
    %65 = vector.shape_cast %64 : vector<1x8x16xf32> to vector<8x16xf32>
    %66 = vector.shape_cast %63 : vector<8x16xf32> to vector<1x8x16xf32>
    tpu.vector_store %arg4[%c0_23, %c0_24, %c0_25], %66 {strides = array<i32>} : memref<1x8x16xf32, #tpu.memory_space<vmem>>, vector<1x8x16xf32>,
    return
  }
  func.func @transform_0(%arg0: i32) -> (i32, i32, i32) {
    %c0_i32 = arith.constant 0 : i32
    %c0_i32_0 = arith.constant 0 : i32
    %c0_i32_1 = arith.constant 0 : i32
    return %arg0, %c0_i32, %c0_i32_0 : i32, i32, i32
  }
  func.func @transform_1(%arg0: i32) -> (i32, i32) {
    %c0_i32 = arith.constant 0 : i32
    %c0_i32_0 = arith.constant 0 : i32
    %c0_i32_1 = arith.constant 0 : i32
    return %c0_i32, %c0_i32_0 : i32, i32
  }
  func.func @transform_2(%arg0: i32) -> i32 {
    %c0_i32 = arith.constant 0 : i32
    %c0_i32_0 = arith.constant 0 : i32
    return %c0_i32 : i32
  }
  func.func @transform_3(%arg0: i32) -> (i32, i32, i32) {
    %c0_i32 = arith.constant 0 : i32
    %c0_i32_0 = arith.constant 0 : i32
    %c0_i32_1 = arith.constant 0 : i32
    return %arg0, %c0_i32, %c0_i32_0 : i32, i32, i32
  }
}

</mosaic_0001>

<llo_original>
// kernel: tpu_custom_call.1
$region0: #{tpu_custom_call.1}
  #allocation0 [shape = 'u32[]', space=smem, size = 0x4, offset = 0x4, fixed_abs, tag = 'smem constant byte address 0x4 - core index']
  #allocation1 [shape = 'u32[144,128]{1,0:T(1,128)}', space=vmem, size = 0x12000, scoped, tag = 'internal scratch']
  #allocation2 [shape = 'f32[1]{0:T(128)S(6)}', space=smem, size = 0x200, scoped, tag = 'scoped memory for tpu_custom_call.1']
  %s0 = inlined_call_operand.vmem [shape: f32[8,10,18], index: 0, kind: input, shape index: {}]
  %s1 = inlined_call_operand.vmem [shape: f32[3,3], index: 1, kind: input, shape index: {}]
  %s2 = inlined_call_operand.<no memory space> [shape: f32[1], index: 2, kind: input, shape index: {}]
  %s3 = inlined_call_operand.hbm [shape: f32[8,8,16], index: 3, kind: output, shape index: {}]
  %s4 = sld [smem:[#allocation0]]
  $region49: #{tpu_custom_call.1} parent=0
    _
  %s6 = ssub.s32 1, %s4
  %s7 = scalar_select 0, %s6, %s4
  %8 = sst [smem:[#allocation2]] %s2
  $region1: #{tpu_custom_call.1} parent=0
    #allocation3 [shape = 'u8[2048]{0}', space=smem, size = 0x800, scoped, tag = 'input window, operand 1, single buffered']
    #allocation4 [shape = 's32[2]{0}', space=sflag, size = 0x8, scoped, tag = 'scoped memory for tpu_custom_call.1']
    #allocation5 [shape = 's32[2]{0}', space=sflag, size = 0x8, scoped, tag = 'scoped memory for tpu_custom_call.1']
    #allocation6 [shape = 'u8[8192]{0}', space=vmem, size = 0x2000, scoped, tag = 'output window, operand 0']
    %9 = vsyncpa [#allocation5], 0
    %10 = vsyncpa [#allocation4], 0
    %s11 = scalar_lea.sflag [#allocation4], 1
    %12 = vsyncpa %s11, 0
    loop: start=0, step=1, limit=10
    $region2: #{tpu_custom_call.1} parent=1 // loop_pre_header
      _
    $region3: #{tpu_custom_call.1} parent=1 // loop_header
      %s14 = sphi 0, %s18
      %p15 = scmp.ge.s32.totalorder %s14, 10
      %s24 = sphi 0, %s26
      %s27 = sphi 0, %s24
      %s28 = sphi 0, %s27
      %s44 = sphi 0, %s28
      %s48 = sphi 0, %s48
      %s50 = sphi 0, %s48
      %s51 = sphi 0, %s50
      %s65 = sphi 0, %s51
      %s69 = sphi 0, %s69
      %s71 = sphi 0, %s69
      %s72 = sphi 0, %s71
      %s86 = sphi 0, %s72
      %s92 = sphi 0, %s94
      %s95 = sphi 0, %s92
      %s96 = sphi 0, %s95
      %s112 = sphi 0, %s96
    $region4: #{tpu_custom_call.1} parent=1 // loop_header_branch
      %17 = sbr.rel (%p15) target = $region8
    $region5: #{tpu_custom_call.1} parent=1 // loop_body
      %s19 = ssub.s32 %s14, 1
      %s20 = ssub.s32 %s14, 2
      %s21 = sadd.s32 %s14, 1
      %s22 = ssub.s32 %s14, %s21
      %p23 = scmp.eq.s32.totalorder %s22, 0
      %s25 = sadd.s32 %s24, 1
      %s26 = scalar_select %p23, %s24, %s25
      %p29 = pneg %p23
      %p30 = scmp.eq.s32.totalorder %s14, 7
      %p31 = por %p29, %p30
      %p32 = scmp.ne.s32.totalorder %s24, %s27
      %p33 = scmp.eq.s32.totalorder %s14, 0
      %p34 = por %p32, %p33
      %p35 = scmp.ne.s32.totalorder %s24, %s27
      %p36 = scmp.eq.s32.totalorder %s19, 7
      %p37 = por %p35, %p36
      %p38 = scmp.ne.s32.totalorder %s27, %s28
      %p39 = scmp.eq.s32.totalorder %s19, 0
      %p40 = por %p38, %p39
      %p41 = scmp.ne.s32.totalorder %s27, %s28
      %p42 = scmp.eq.s32.totalorder %s20, 7
      %p43 = por %p41, %p42
      %p45 = scmp.ne.s32.totalorder %s28, %s44
      %p46 = scmp.eq.s32.totalorder %s20, 0
      %p47 = por %p45, %p46
      %s49 = sadd.s32 %s48, 1
      %p52 = scmp.eq.s32.totalorder %s14, 7
      %p53 = scmp.ne.s32.totalorder %s48, %s50
      %p54 = scmp.eq.s32.totalorder %s14, 0
      %p55 = por %p53, %p54
      %p56 = scmp.ne.s32.totalorder %s48, %s50
      %p57 = scmp.eq.s32.totalorder %s19, 7
      %p58 = por %p56, %p57
      %p59 = scmp.ne.s32.totalorder %s50, %s51
      %p60 = scmp.eq.s32.totalorder %s19, 0
      %p61 = por %p59, %p60
      %p62 = scmp.ne.s32.totalorder %s50, %s51
      %p63 = scmp.eq.s32.totalorder %s20, 7
      %p64 = por %p62, %p63
      %p66 = scmp.ne.s32.totalorder %s51, %s65
      %p67 = scmp.eq.s32.totalorder %s20, 0
      %p68 = por %p66, %p67
      %s70 = sadd.s32 %s69, 1
      %p73 = scmp.eq.s32.totalorder %s14, 7
      %p74 = scmp.ne.s32.totalorder %s69, %s71
      %p75 = scmp.eq.s32.totalorder %s14, 0
      %p76 = por %p74, %p75
      %p77 = scmp.ne.s32.totalorder %s69, %s71
      %p78 = scmp.eq.s32.totalorder %s19, 7
      %p79 = por %p77, %p78
      %p80 = scmp.ne.s32.totalorder %s71, %s72
      %p81 = scmp.eq.s32.totalorder %s19, 0
      %p82 = por %p80, %p81
      %p83 = scmp.ne.s32.totalorder %s71, %s72
      %p84 = scmp.eq.s32.totalorder %s20, 7
      %p85 = por %p83, %p84
      %p87 = scmp.ne.s32.totalorder %s72, %s86
      %p88 = scmp.eq.s32.totalorder %s20, 0
      %p89 = por %p87, %p88
      %s90 = ssub.s32 %s14, %s21
      %p91 = scmp.eq.s32.totalorder %s90, 0
      %s93 = sadd.s32 %s92, 1
      %s94 = scalar_select %p91, %s92, %s93
      %p97 = pneg %p91
      %p98 = scmp.eq.s32.totalorder %s14, 7
      %p99 = por %p97, %p98
      %p100 = scmp.ne.s32.totalorder %s92, %s95
      %p101 = scmp.eq.s32.totalorder %s14, 0
      %p102 = por %p100, %p101
      %p103 = scmp.ne.s32.totalorder %s92, %s95
      %p104 = scmp.eq.s32.totalorder %s19, 7
      %p105 = por %p103, %p104
      %p106 = scmp.ne.s32.totalorder %s95, %s96
      %p107 = scmp.eq.s32.totalorder %s19, 0
      %p108 = por %p106, %p107
      %p109 = scmp.ne.s32.totalorder %s95, %s96
      %p110 = scmp.eq.s32.totalorder %s20, 7
      %p111 = por %p109, %p110
      %p113 = scmp.ne.s32.totalorder %s96, %s112
      %p114 = scmp.eq.s32.totalorder %s20, 0
      %p115 = por %p113, %p114
      %p116 = scmp.le.s32.totalorder 1, %s14
      %p117 = scmp.lt.s32.totalorder %s14, 9
      %p118 = pnand %p116, %p117
      %p119 = pneg %p118
      // Predicated region
      $region9: #{tpu_custom_call.1} parent=5 // pred_check
        _
      $region10: #{tpu_custom_call.1} parent=5 // pred_check_branch
        %121 = sbr.rel (%p118) target = $region12
      $region11: #{tpu_custom_call.1} parent=5 // pred_region
        %s122 = ssub.s32 %s14, 1
        // Predicated region
        $region13: #{tpu_custom_call.1} parent=11 // pred_check
          %p123 = pneg %p61
        $region14: #{tpu_custom_call.1} parent=11 // pred_check_branch
          %125 = sbr.rel (%p123) target = $region16
        $region15: #{tpu_custom_call.1} parent=11 // pred_region
          %s127 = ssub.s32 64, 64
          %128 = vsyncadd [#allocation5], %s127
          %s130 = sshll.u32 %s1, 4
          %s131 = int_to_ptr.vmem [resolvable:$true] %s130
          %133 = dma.vmem_to_smem %s131, 64, [#allocation3], [#allocation5]
        $region16: #{tpu_custom_call.1} parent=11 // pred_fallthru
          _
        // Predicated region
        $region17: #{tpu_custom_call.1} parent=11 // pred_check
          %p134 = pneg %p82
        $region18: #{tpu_custom_call.1} parent=11 // pred_check_branch
          %136 = sbr.rel (%p134) target = $region20
        $region19: #{tpu_custom_call.1} parent=11 // pred_region
          _
        $region20: #{tpu_custom_call.1} parent=11 // pred_fallthru
          _
      $region12: #{tpu_custom_call.1} parent=5 // pred_fallthru
        _
      %p137 = scmp.lt.s32.totalorder %s14, 8
      // Predicated region
      $region21: #{tpu_custom_call.1} parent=5 // pred_check
        %p138 = pneg %p137
      $region22: #{tpu_custom_call.1} parent=5 // pred_check_branch
        %140 = sbr.rel (%p138) target = $region24
      $region23: #{tpu_custom_call.1} parent=5 // pred_region
        // Predicated region
        $region25: #{tpu_custom_call.1} parent=23 // pred_check
          %p141 = pneg %p34
        $region26: #{tpu_custom_call.1} parent=23 // pred_check_branch
          %143 = sbr.rel (%p141) target = $region28
        $region27: #{tpu_custom_call.1} parent=23 // pred_region
          %p144 = scmp.lt.s32.totalorder %s14, 7
          %s145 = scalar_select %p144, %s14, 7
          %s146 = smul.addr %s145, 2
          %s147 = smul.addr %s146, 8
          %s148 = scalar_lea.vmem %s0, %s147
        $region28: #{tpu_custom_call.1} parent=23 // pred_fallthru
          _
      $region24: #{tpu_custom_call.1} parent=5 // pred_fallthru
        _
      %p149 = scmp.le.s32.totalorder 1, %s14
      %p150 = scmp.lt.s32.totalorder %s14, 9
      %p151 = pnand %p149, %p150
      %p152 = pneg %p151
      // Predicated region
      $region29: #{tpu_custom_call.1} parent=5 // pred_check
        _
      $region30: #{tpu_custom_call.1} parent=5 // pred_check_branch
        %154 = sbr.rel (%p151) target = $region32
      $region31: #{tpu_custom_call.1} parent=5 // pred_region
        %s155 = ssub.s32 %s14, 1
        // Predicated region
        $region33: #{tpu_custom_call.1} parent=31 // pred_check
          %p156 = pneg %p61
        $region34: #{tpu_custom_call.1} parent=31 // pred_check_branch
          %158 = sbr.rel (%p156) target = $region36
        $region35: #{tpu_custom_call.1} parent=31 // pred_region
          %159 = dma.done [#allocation5], 64
        $region36: #{tpu_custom_call.1} parent=31 // pred_fallthru
          _
        %160 = sfence
        %p161 = scmp.lt.s32.totalorder %s19, 7
        %s162 = scalar_select %p161, %s19, 7
        %s163 = smul.addr %s162, 2
        %s164 = smul.addr %s163, 8
        %s165 = scalar_lea.vmem %s0, %s164
        %p166 = pneg %p40
        %p167 = pneg %p37
        %p168 = pneg %p61
        %p169 = pneg %p58
        %p170 = pneg %p82
        %p171 = pneg %p79
        %p172 = pneg %p108
        %p173 = pneg %p105
        %s174 = sand.u32 %s95, 1
        %s175 = scalar_lea.sflag [#allocation4], %s174
        %s176 = sand.u32 %s95, 1
        %s177 = smul.addr %s176, 8
        %s178 = scalar_lea.vmem [#allocation6], %s177
        %p179 = scmp.lt.s32.totalorder %s19, 7
        %s180 = scalar_select %p179, %s19, 7
        %s181 = smul.addr %s180, 2
        %s182 = smul.addr %s181, 8
        %s183 = scalar_lea.vmem %s0, %s182
        %v184 = vld [vmem:[%s183] sm:$0xff]
        %v185 = vld [vmem:[%s183 + $0x8] sm:$0x3]
        %s186 = sld [smem:[#allocation3]]
        %v187 = vstv %s186
        %v188 = vmul.f32 %v187, %v184
        %v189 = vadd.f32 %v188, 0.0
        %s190 = sld [smem:[#allocation3 + $0x1]]
        %v191 = vstv %s190
        %v192 = vmul.f32 %v191, %v184
        %194 = vrot.lane.b32.xlu0 %v192, 127
        %v195 = vpop.permute.xlu0 %194
        %v197 = vadd.f32 %v189, %v195
        %s198 = sld [smem:[#allocation3 + $0x2]]
        %v199 = vstv %s198
        %v200 = vmul.f32 %v199, %v184
        %202 = vrot.lane.b32.xlu0 %v200, 126
        %v203 = vpop.permute.xlu0 %202
        %v205 = vadd.f32 %v197, %v203
        %s206 = sld [smem:[#allocation3 + $0x80]]
        %v207 = vstv %s206
        %v208 = vmul.f32 %v207, %v184
        %v209 = vmul.f32 %v207, %v185
        %vm212 = vcmask 1046528
        %v213 = vrot.slane %v208, 1
        %v214 = vrot.slane %v209, 1
        %v215 = vsel %vm212, %v213, %v214
        %v217 = vadd.f32 %v205, %v215
        %s218 = sld [smem:[#allocation3 + $0x81]]
        %v219 = vstv %s218
        %v220 = vmul.f32 %v219, %v184
        %v221 = vmul.f32 %v219, %v185
        %v224 = vrot.slane %v220, 1
        %v225 = vrot.slane %v221, 1
        %v226 = vsel %vm212, %v224, %v225
        %227 = vrot.lane.b32.xlu0 %v226, 127
        %v228 = vpop.permute.xlu0 %227
        %v230 = vadd.f32 %v217, %v228
        %s231 = sld [smem:[#allocation3 + $0x82]]
        %v232 = vstv %s231
        %v233 = vmul.f32 %v232, %v184
        %v234 = vmul.f32 %v232, %v185
        %v237 = vrot.slane %v233, 1
        %v238 = vrot.slane %v234, 1
        %v239 = vsel %vm212, %v237, %v238
        %240 = vrot.lane.b32.xlu0 %v239, 126
        %v241 = vpop.permute.xlu0 %240
        %v243 = vadd.f32 %v230, %v241
        %s244 = sld [smem:[#allocation3 + $0x100]]
        %v245 = vstv %s244
        %v246 = vmul.f32 %v245, %v184
        %v247 = vmul.f32 %v245, %v185
        %vm250 = vcmask 1045504
        %v251 = vrot.slane %v246, 2
        %v252 = vrot.slane %v247, 2
        %v253 = vsel %vm250, %v251, %v252
        %v255 = vadd.f32 %v243, %v253
        %s256 = sld [smem:[#allocation3 + $0x101]]
        %v257 = vstv %s256
        %v258 = vmul.f32 %v257, %v184
        %v259 = vmul.f32 %v257, %v185
        %v262 = vrot.slane %v258, 2
        %v263 = vrot.slane %v259, 2
        %v264 = vsel %vm250, %v262, %v263
        %265 = vrot.lane.b32.xlu0 %v264, 127
        %v266 = vpop.permute.xlu0 %265
        %v268 = vadd.f32 %v255, %v266
        %s269 = sld [smem:[#allocation3 + $0x102]]
        %v270 = vstv %s269
        %v271 = vmul.f32 %v270, %v184
        %v272 = vmul.f32 %v270, %v185
        %v275 = vrot.slane %v271, 2
        %v276 = vrot.slane %v272, 2
        %v277 = vsel %vm250, %v275, %v276
        %278 = vrot.lane.b32.xlu0 %v277, 126
        %v279 = vpop.permute.xlu0 %278
        %v281 = vadd.f32 %v268, %v279
        %s282 = sld [smem:[#allocation2]]
        %v283 = vstv %s282
        %v284 = vadd.f32 %v281, %v283
        %v285 = vmul.f32 %v284, 0.5
        %v286 = vmul.f32 %v284, 0.044715
        %v287 = vmul.f32 %v286, %v284
        %v288 = vmul.f32 %v287, %v284
        %v289 = vadd.f32 %v284, %v288
        %v290 = vmul.f32 %v289, 0.7978846
        %v291 = vtanh.pop %v290
        %v292 = vadd.f32 %v291, 1.0
        %v293 = vmul.f32 %v285, %v292
        %vm294 = vcmask 130048
        %295 = vst.msk [vmem:[%s178] sm:$0xff] %vm294, %v293
        %s296 = sand.u32 %s95, 1
        %s297 = scalar_lea.sflag [#allocation4], %s296
        %s298 = sand.u32 %s95, 1
        %s299 = smul.addr %s298, 8
        %s300 = scalar_lea.vmem [#allocation6], %s299
        // Predicated region
        $region37: #{tpu_custom_call.1} parent=31 // pred_check
          %p301 = pneg %p105
        $region38: #{tpu_custom_call.1} parent=31 // pred_check_branch
          %303 = sbr.rel (%p301) target = $region40
        $region39: #{tpu_custom_call.1} parent=31 // pred_region
          %s305 = ssub.s32 128, 128
          %306 = vsyncadd %s297, %s305
          %s307 = smul.addr %s19, 128
          %s308 = scalar_lea.hbm %s3, %s307
          %s310 = sshll.u32 %s300, 4
          %s311 = int_to_ptr.vmem [resolvable:$true] %s310
          %313 = dma.vmem_to_hbm [thread:$0]  %s311, 128, %s308, %s297
        $region40: #{tpu_custom_call.1} parent=31 // pred_fallthru
          _
      $region32: #{tpu_custom_call.1} parent=5 // pred_fallthru
        _
      %p314 = scmp.le.s32.totalorder 2, %s14
      // Predicated region
      $region41: #{tpu_custom_call.1} parent=5 // pred_check
        %p315 = pneg %p314
      $region42: #{tpu_custom_call.1} parent=5 // pred_check_branch
        %317 = sbr.rel (%p315) target = $region44
      $region43: #{tpu_custom_call.1} parent=5 // pred_region
        %s318 = ssub.s32 %s14, 2
        // Predicated region
        $region45: #{tpu_custom_call.1} parent=43 // pred_check
          %p319 = pneg %p111
        $region46: #{tpu_custom_call.1} parent=43 // pred_check_branch
          %321 = sbr.rel (%p319) target = $region48
        $region47: #{tpu_custom_call.1} parent=43 // pred_region
          %s322 = sand.u32 %s96, 1
          %s323 = scalar_lea.sflag [#allocation4], %s322
          %s324 = sand.u32 %s96, 1
          %s325 = smul.addr %s324, 8
          %s326 = scalar_lea.vmem [#allocation6], %s325
          %327 = dma.done %s323, 128
        $region48: #{tpu_custom_call.1} parent=43 // pred_fallthru
          _
      $region44: #{tpu_custom_call.1} parent=5 // pred_fallthru
        _
    $region6: #{tpu_custom_call.1} parent=1 // loop_footer
      %s18 = sadd.s32 1, %s14
    $region7: #{tpu_custom_call.1} parent=1 // loop_footer_branch
      %13 = sbr.rel target = $region3
    $region8: #{tpu_custom_call.1} parent=1 // loop_exit
      _
    %328 = vsyncpa [#allocation4], 1
    %s329 = scalar_lea.sflag [#allocation4], 1
    %330 = vsyncpa %s329, 1
    %331 = vsyncpa [#allocation5], 1
    %s332 = scalar_lea.sflag [#allocation5], 1
    %333 = vsyncpa %s332, 1

</llo_original>
